<compile_context>
chip_gen: v5e
topology: v5e:2x2
jax: 0.10.0
libtpu: 0.0.40
codegen_flags: <defaults>
</compile_context>

<pallas_src>
import functools

import jax
import jax.numpy as jnp
from jax import lax
from jax.experimental import pallas as pl
from jax.experimental.pallas import tpu as pltpu


def _mlp_block_kernel(x_ref, w1_ref, w2_ref, b_ref, o_ref, *, eps):
    """One row-tile of: out = x + relu(LN_noaffine(x) @ W1' + b1') @ W2 + b2.

    x_ref:  (TM, D) activations (any float dtype; LN math runs in f32).
    w1_ref: (D, D) bf16, LayerNorm gamma already folded in, laid out (in, out).
    w2_ref: (D, D) bf16, laid out (in, out).
    b_ref:  (2, D) f32 -- row 0 = b1' (beta @ W1 folded in), row 1 = b2.
    """
    x = x_ref[...].astype(jnp.float32)

    # LayerNorm (no affine -- folded into W1/b1). Lane reductions -> XLU.
    mean = jnp.mean(x, axis=-1, keepdims=True)
    xc = x - mean
    var = jnp.mean(xc * xc, axis=-1, keepdims=True)
    xn = xc * lax.rsqrt(var + eps)

    # Linear -> ReLU -> Linear: bf16 operands on the MXU, f32 accumulation,
    # elementwise in f32 on the VPU.
    h = jnp.dot(xn.astype(w1_ref.dtype), w1_ref[...],
                preferred_element_type=jnp.float32)
    h = jnp.maximum(h + b_ref[0:1, :], 0.0)
    y = jnp.dot(h.astype(w2_ref.dtype), w2_ref[...],
                preferred_element_type=jnp.float32)
    y = y + b_ref[1:2, :]

    # Residual: re-read x from the resident VMEM input block so the f32 copy
    # of x is not kept live across both matmuls (less spill traffic).
    o_ref[...] = (x_ref[...].astype(jnp.float32) + y).astype(o_ref.dtype)


def _round_up(n, m):
    return ((n + m - 1) // m) * m


def _vmem_capacity_bytes():
    try:
        return int(pltpu.get_tpu_info().vmem_capacity_bytes)
    except Exception:  # conservative fallback: v7x per-TC VMEM
        return 64 << 20


def _weight_specs(d, single_buffer):
    """Resident (constant-index) DxD weight specs for W1 and W2."""
    idx = lambda i: (0, 0)
    if single_buffer:
        # Constant index_map -> there is never a "next" block to prefetch, so
        # a single buffer is enough; halves the weight VMEM footprint.
        make = lambda: pl.BlockSpec((d, d), idx, pipeline_mode=pl.Buffered(1))
    else:
        make = lambda: pl.BlockSpec((d, d), idx)
    return make(), make()


def prepare_mlp_block_params(gamma, beta, w1, b1, w2, b2,
                             compute_dtype=jnp.bfloat16):
    """One-time parameter prep (call once, NOT per forward).

    Folds the LayerNorm affine into the first Linear in f32:
        W1' = gamma[:, None] * W1        b1' = b1 + beta @ W1
    then casts the weights to the MXU compute dtype (bf16).
    w1/w2 are stored as (in, out), i.e. the transpose of torch's (out, in).
    """
    d = w1.shape[0]
    gamma = gamma.astype(jnp.float32)
    beta = beta.astype(jnp.float32)
    w1f = w1.astype(jnp.float32)
    w1p = (gamma[:, None] * w1f).astype(compute_dtype)
    b1p = b1.astype(jnp.float32) + beta @ w1f
    w2p = w2.astype(compute_dtype)
    biases = jnp.stack([b1p, b2.astype(jnp.float32)], axis=0).reshape(2, d)
    return w1p, w2p, biases


def mlp_block_pallas(x, w1p, w2p, biases, *, eps=1e-5, row_tile=1024):
    """Fused MLPBlock forward: x + MLP(LayerNorm(x)), with prepared params."""
    orig_shape = x.shape
    d = orig_shape[-1]
    x2 = x.reshape(-1, d)
    m = x2.shape[0]
    x_bytes = x2.dtype.itemsize
    w_bytes = w1p.dtype.itemsize

    # --- VMEM budget & row-tile choice --------------------------------------
    capacity = _vmem_capacity_bytes()
    ceiling = max(32 << 20, capacity - (16 << 20))   # leave compiler headroom
    # Account weights conservatively at 2 buffers (covers the no-Buffered(1)
    # fallback path); with Buffered(1) the real footprint is half of this.
    weight_bytes = 2 * 2 * d * d * w_bytes
    bias_bytes = 2 * 2 * 8 * d * 4                   # (2,d) block, 2 bufs, 8-sublane pad
    fixed_bytes = weight_bytes + bias_bytes + (2 << 20)

    def tile_bytes(tm):
        io = 2 * 2 * tm * d * x_bytes                # x + out blocks, double-buffered
        work = 4 * tm * d * 4                        # f32 x/xn/h/y working set
        return io + work

    # Largest multiple-of-8 row tile <= row_tile (and <= padded M) that fits.
    tm = max(8, min(_round_up(row_tile, 8), _round_up(m, 8)))
    while tm > 8 and fixed_bytes + tile_bytes(tm) > ceiling:
        tm -= 8
    # Give the second TensorCore (v7x) at least one block when M allows.
    if pl.cdiv(m, tm) < 2 and m > 8:
        tm = _round_up(pl.cdiv(m, 2), 8)

    grid_m = pl.cdiv(m, tm)
    m_pad = grid_m * tm
    if m_pad != m:
        x2 = jnp.pad(x2, ((0, m_pad - m), (0, 0)))   # zero rows: LN-safe, sliced off

    vmem_limit = int(min(max(fixed_bytes + tile_bytes(tm) + (4 << 20), 32 << 20),
                         ceiling))

    kernel = functools.partial(_mlp_block_kernel, eps=eps)

    def run(w_specs):
        w1_spec, w2_spec = w_specs
        return pl.pallas_call(
            kernel,
            out_shape=jax.ShapeDtypeStruct((m_pad, d), x.dtype),
            grid_spec=pltpu.PrefetchScalarGridSpec(
                num_scalar_prefetch=0,
                grid=(grid_m,),
                in_specs=[
                    pl.BlockSpec((tm, d), lambda i: (i, 0)),   # x rows
                    w1_spec,                                   # W1' (resident)
                    w2_spec,                                   # W2  (resident)
                    pl.BlockSpec((2, d), lambda i: (0, 0)),    # [b1'; b2]
                ],
                out_specs=pl.BlockSpec((tm, d), lambda i: (i, 0)),
            ),
            compiler_params=pltpu.CompilerParams(
                dimension_semantics=("parallel",),
                vmem_limit_bytes=vmem_limit,
            ),
        )(x2, w1p, w2p, biases)

    try:
        out = run(_weight_specs(d, single_buffer=True))
    except Exception:
        # pl.Buffered(1) unsupported on this jax/Mosaic build: fall back to the
        # default double-buffered weight specs (costs 2x weight VMEM only).
        out = run(_weight_specs(d, single_buffer=False))

    if m_pad != m:
        out = out[:m]
    return out.reshape(orig_shape)


def init_params(key, dim, dtype=jnp.float32):
    """Mirror PyTorch defaults for Linear (U(-1/sqrt(dim), 1/sqrt(dim)));
    LayerNorm affine params randomized (instead of 1/0) to exercise the path."""
    k1, k2, k3, k4, k5, k6 = jax.random.split(key, 6)
    bound = 1.0 / (dim ** 0.5)
    w1 = jax.random.uniform(k1, (dim, dim), dtype, -bound, bound)   # (in, out)
    b1 = jax.random.uniform(k2, (dim,), dtype, -bound, bound)
    w2 = jax.random.uniform(k3, (dim, dim), dtype, -bound, bound)   # (in, out)
    b2 = jax.random.uniform(k4, (dim,), dtype, -bound, bound)
    gamma = 1.0 + 0.1 * jax.random.normal(k5, (dim,), dtype)
    beta = 0.1 * jax.random.normal(k6, (dim,), dtype)
    return gamma, beta, w1, b1, w2, b2


def mlp_block_reference(x, gamma, beta, w1, b1, w2, b2, eps=1e-5):
    mean = jnp.mean(x, axis=-1, keepdims=True)
    var = jnp.mean((x - mean) ** 2, axis=-1, keepdims=True)
    xn = (x - mean) / jnp.sqrt(var + eps) * gamma + beta
    h = jnp.maximum(xn @ w1 + b1, 0.0)
    return x + (h @ w2 + b2)


if __name__ == "__main__":
    key = jax.random.PRNGKey(0)
    k_x, k_p = jax.random.split(key)

    # Small demo shapes consistent with the module: batch=2, seq=8, dim=128
    # (dim is a multiple of 128 so blocks are lane-dense).
    B, S, D = 2, 8, 128
    x = jax.random.normal(k_x, (B, S, D), dtype=jnp.float32)
    gamma, beta, w1, b1, w2, b2 = init_params(k_p, D)

    # One-time prep (LN-affine fold + bf16 cast) hoisted out of the hot path.
    w1p, w2p, biases = prepare_mlp_block_params(gamma, beta, w1, b1, w2, b2)

    y = mlp_block_pallas(x, w1p, w2p, biases)
    y = jax.block_until_ready(y)

    y_ref = mlp_block_reference(x, gamma, beta, w1, b1, w2, b2)
    assert y.shape == (B, S, D)
    # bf16 matmul operands (f32 accumulation) vs a pure-f32 reference.
    max_err = float(jnp.max(jnp.abs(y - y_ref)))
    assert jnp.allclose(y, y_ref, atol=3e-2, rtol=3e-2), f"mismatch: {max_err}"

    print("KERNEL_OK")
</pallas_src>

<mosaic_0001>
module attributes {stable_mosaic.version = 11 : i64} {
  func.func @_mlp_block_kernel(%arg0: i32, %arg1: memref<8x128xf32, #tpu.memory_space<vmem>>, %arg2: memref<128x128xbf16, #tpu.memory_space<vmem>>, %arg3: memref<128x128xbf16, #tpu.memory_space<vmem>>, %arg4: memref<2x128xf32, #tpu.memory_space<vmem>>, %arg5: memref<8x128xf32, #tpu.memory_space<vmem>>) attributes {dimension_semantics = [#tpu.dimension_semantics<parallel>], iteration_bounds = array<i64: 2>, scalar_prefetch = 0 : i64, scratch_operands = 0 : i64, tpu.core_type = #tpu.core_type<tc>, window_params = [{transform_indices = @transform_0, window_bounds = array<i64: 8, 128>}, {pipeline_mode = #tpu.pipeline_mode<synchronous>, transform_indices = @transform_1, window_bounds = array<i64: 128, 128>}, {pipeline_mode = #tpu.pipeline_mode<synchronous>, transform_indices = @transform_2, window_bounds = array<i64: 128, 128>}, {pipeline_mode = #tpu.pipeline_mode<synchronous>, transform_indices = @transform_3, window_bounds = array<i64: 2, 128>}, {transform_indices = @transform_4, window_bounds = array<i64: 8, 128>}]} {
    %c0 = arith.constant 0 : index
    %c0_0 = arith.constant 0 : index
    %0 = vector.load %arg1[%c0, %c0_0] : memref<8x128xf32, #tpu.memory_space<vmem>>, vector<8x128xf32>
    %cst = arith.constant dense<0.000000e+00> : vector<8xf32>
    %1 = vector.multi_reduction <add>, %0, %cst [1] : vector<8x128xf32> to vector<8xf32>
    %2 = vector.shape_cast %1 : vector<8xf32> to vector<8x1xf32>
    %cst_1 = arith.constant 1.280000e+02 : f32
    %3 = vector.broadcast %cst_1 : f32 to vector<8x1xf32>
    %4 = arith.divf %2, %3 : vector<8x1xf32>
    %5 = vector.broadcast %4 : vector<8x1xf32> to vector<8x128xf32>
    %6 = arith.subf %0, %5 : vector<8x128xf32>
    %7 = arith.mulf %6, %6 : vector<8x128xf32>
    %cst_2 = arith.constant dense<0.000000e+00> : vector<8xf32>
    %8 = vector.multi_reduction <add>, %7, %cst_2 [1] : vector<8x128xf32> to vector<8xf32>
    %9 = vector.shape_cast %8 : vector<8xf32> to vector<8x1xf32>
    %cst_3 = arith.constant 1.280000e+02 : f32
    %10 = vector.broadcast %cst_3 : f32 to vector<8x1xf32>
    %11 = arith.divf %9, %10 : vector<8x1xf32>
    %cst_4 = arith.constant 9.99999974E-6 : f32
    %12 = vector.broadcast %cst_4 : f32 to vector<8x1xf32>
    %13 = arith.addf %11, %12 : vector<8x1xf32>
    %14 = math.rsqrt %13 : vector<8x1xf32>
    %15 = vector.broadcast %14 : vector<8x1xf32> to vector<8x128xf32>
    %16 = arith.mulf %6, %15 : vector<8x128xf32>
    %17 = arith.truncf %16 : vector<8x128xf32> to vector<8x128xbf16>
    %c0_5 = arith.constant 0 : index
    %c0_6 = arith.constant 0 : index
    %18 = vector.load %arg2[%c0_5, %c0_6] : memref<128x128xbf16, #tpu.memory_space<vmem>>, vector<128x128xbf16>
    %cst_7 = arith.constant dense<0.000000e+00> : vector<8x128xf32>
    %19 = tpu.matmul %17, %18, %cst_7 {dimension_numbers = #tpu.dot_dimension_numbers<[1], [0], [0], [1], [0, 0, 1, 1], [], []>} : vector<8x128xbf16>, vector<128x128xbf16>, vector<8x128xf32> -> vector<8x128xf32>
    %c0_8 = arith.constant 0 : index
    %c0_9 = arith.constant 0 : index
    %20 = vector.load %arg4[%c0_8, %c0_9] : memref<2x128xf32, #tpu.memory_space<vmem>>, vector<1x128xf32>
    %21 = vector.broadcast %20 : vector<1x128xf32> to vector<8x128xf32>
    %22 = arith.addf %19, %21 : vector<8x128xf32>
    %cst_10 = arith.constant 0.000000e+00 : f32
    %23 = vector.broadcast %cst_10 : f32 to vector<8x128xf32>
    %24 = arith.maximumf %22, %23 : vector<8x128xf32>
    %25 = arith.truncf %24 : vector<8x128xf32> to vector<8x128xbf16>
    %c0_11 = arith.constant 0 : index
    %c0_12 = arith.constant 0 : index
    %26 = vector.load %arg3[%c0_11, %c0_12] : memref<128x128xbf16, #tpu.memory_space<vmem>>, vector<128x128xbf16>
    %cst_13 = arith.constant dense<0.000000e+00> : vector<8x128xf32>
    %27 = tpu.matmul %25, %26, %cst_13 {dimension_numbers = #tpu.dot_dimension_numbers<[1], [0], [0], [1], [0, 0, 1, 1], [], []>} : vector<8x128xbf16>, vector<128x128xbf16>, vector<8x128xf32> -> vector<8x128xf32>
    %c1 = arith.constant 1 : index
    %c0_14 = arith.constant 0 : index
    %28 = vector.load %arg4[%c1, %c0_14] : memref<2x128xf32, #tpu.memory_space<vmem>>, vector<1x128xf32>
    %29 = vector.broadcast %28 : vector<1x128xf32> to vector<8x128xf32>
    %30 = arith.addf %27, %29 : vector<8x128xf32>
    %c0_15 = arith.constant 0 : index
    %c0_16 = arith.constant 0 : index
    %31 = vector.load %arg1[%c0_15, %c0_16] : memref<8x128xf32, #tpu.memory_space<vmem>>, vector<8x128xf32>
    %32 = arith.addf %31, %30 : vector<8x128xf32>
    %c0_17 = arith.constant 0 : index
    %c0_18 = arith.constant 0 : index
    %33 = vector.load %arg5[%c0_17, %c0_18] : memref<8x128xf32, #tpu.memory_space<vmem>>, vector<8x128xf32>
    tpu.vector_store %arg5[%c0_17, %c0_18], %32 {strides = array<i32>} : memref<8x128xf32, #tpu.memory_space<vmem>>, vector<8x128xf32>,
    return
  }
  func.func @transform_0(%arg0: i32) -> (i32, i32) {
    %c0_i32 = arith.constant 0 : i32
    %c0_i32_0 = arith.constant 0 : i32
    return %arg0, %c0_i32 : i32, i32
  }
  func.func @transform_1(%arg0: i32) -> (i32, i32) {
    %c0_i32 = arith.constant 0 : i32
    %c0_i32_0 = arith.constant 0 : i32
    %c0_i32_1 = arith.constant 0 : i32
    return %c0_i32, %c0_i32_0 : i32, i32
  }
  func.func @transform_2(%arg0: i32) -> (i32, i32) {
    %c0_i32 = arith.constant 0 : i32
    %c0_i32_0 = arith.constant 0 : i32
    %c0_i32_1 = arith.constant 0 : i32
    return %c0_i32, %c0_i32_0 : i32, i32
  }
  func.func @transform_3(%arg0: i32) -> (i32, i32) {
    %c0_i32 = arith.constant 0 : i32
    %c0_i32_0 = arith.constant 0 : i32
    %c0_i32_1 = arith.constant 0 : i32
    return %c0_i32, %c0_i32_0 : i32, i32
  }
  func.func @transform_4(%arg0: i32) -> (i32, i32) {
    %c0_i32 = arith.constant 0 : i32
    %c0_i32_0 = arith.constant 0 : i32
    return %arg0, %c0_i32 : i32, i32
  }
}

module attributes {stable_mosaic.version = 11 : i64} {
  func.func @_mlp_block_kernel(%arg0: i32, %arg1: memref<8x128xf32, #tpu.memory_space<vmem>>, %arg2: memref<128x128xbf16, #tpu.memory_space<vmem>>, %arg3: memref<128x128xbf16, #tpu.memory_space<vmem>>, %arg4: memref<2x128xf32, #tpu.memory_space<vmem>>, %arg5: memref<8x128xf32, #tpu.memory_space<vmem>>) attributes {dimension_semantics = [#tpu.dimension_semantics<parallel>], iteration_bounds = array<i64: 2>, scalar_prefetch = 0 : i64, scratch_operands = 0 : i64, tpu.core_type = #tpu.core_type<tc>, window_params = [{transform_indices = @transform_0, window_bounds = array<i64: 8, 128>}, {pipeline_mode = #tpu.pipeline_mode<synchronous>, transform_indices = @transform_1, window_bounds = array<i64: 128, 128>}, {pipeline_mode = #tpu.pipeline_mode<synchronous>, transform_indices = @transform_2, window_bounds = array<i64: 128, 128>}, {pipeline_mode = #tpu.pipeline_mode<synchronous>, transform_indices = @transform_3, window_bounds = array<i64: 2, 128>}, {transform_indices = @transform_4, window_bounds = array<i64: 8, 128>}]} {
    %c0 = arith.constant 0 : index
    %c0_0 = arith.constant 0 : index
    %0 = vector.load %arg1[%c0, %c0_0] : memref<8x128xf32, #tpu.memory_space<vmem>>, vector<8x128xf32>
    %cst = arith.constant dense<0.000000e+00> : vector<8xf32>
    %1 = vector.multi_reduction <add>, %0, %cst [1] : vector<8x128xf32> to vector<8xf32>
    %2 = vector.shape_cast %1 : vector<8xf32> to vector<8x1xf32>
    %cst_1 = arith.constant 1.280000e+02 : f32
    %3 = vector.broadcast %cst_1 : f32 to vector<8x1xf32>
    %4 = arith.divf %2, %3 : vector<8x1xf32>
    %5 = vector.broadcast %4 : vector<8x1xf32> to vector<8x128xf32>
    %6 = arith.subf %0, %5 : vector<8x128xf32>
    %7 = arith.mulf %6, %6 : vector<8x128xf32>
    %cst_2 = arith.constant dense<0.000000e+00> : vector<8xf32>
    %8 = vector.multi_reduction <add>, %7, %cst_2 [1] : vector<8x128xf32> to vector<8xf32>
    %9 = vector.shape_cast %8 : vector<8xf32> to vector<8x1xf32>
    %cst_3 = arith.constant 1.280000e+02 : f32
    %10 = vector.broadcast %cst_3 : f32 to vector<8x1xf32>
    %11 = arith.divf %9, %10 : vector<8x1xf32>
    %cst_4 = arith.constant 9.99999974E-6 : f32
    %12 = vector.broadcast %cst_4 : f32 to vector<8x1xf32>
    %13 = arith.addf %11, %12 : vector<8x1xf32>
    %14 = math.rsqrt %13 : vector<8x1xf32>
    %15 = vector.broadcast %14 : vector<8x1xf32> to vector<8x128xf32>
    %16 = arith.mulf %6, %15 : vector<8x128xf32>
    %17 = arith.truncf %16 : vector<8x128xf32> to vector<8x128xbf16>
    %c0_5 = arith.constant 0 : index
    %c0_6 = arith.constant 0 : index
    %18 = vector.load %arg2[%c0_5, %c0_6] : memref<128x128xbf16, #tpu.memory_space<vmem>>, vector<128x128xbf16>
    %cst_7 = arith.constant dense<0.000000e+00> : vector<8x128xf32>
    %19 = tpu.matmul %17, %18, %cst_7 {dimension_numbers = #tpu.dot_dimension_numbers<[1], [0], [0], [1], [0, 0, 1, 1], [], []>} : vector<8x128xbf16>, vector<128x128xbf16>, vector<8x128xf32> -> vector<8x128xf32>
    %c0_8 = arith.constant 0 : index
    %c0_9 = arith.constant 0 : index
    %20 = vector.load %arg4[%c0_8, %c0_9] : memref<2x128xf32, #tpu.memory_space<vmem>>, vector<1x128xf32>
    %21 = vector.broadcast %20 : vector<1x128xf32> to vector<8x128xf32>
    %22 = arith.addf %19, %21 : vector<8x128xf32>
    %cst_10 = arith.constant 0.000000e+00 : f32
    %23 = vector.broadcast %cst_10 : f32 to vector<8x128xf32>
    %24 = arith.maximumf %22, %23 : vector<8x128xf32>
    %25 = arith.truncf %24 : vector<8x128xf32> to vector<8x128xbf16>
    %c0_11 = arith.constant 0 : index
    %c0_12 = arith.constant 0 : index
    %26 = vector.load %arg3[%c0_11, %c0_12] : memref<128x128xbf16, #tpu.memory_space<vmem>>, vector<128x128xbf16>
    %cst_13 = arith.constant dense<0.000000e+00> : vector<8x128xf32>
    %27 = tpu.matmul %25, %26, %cst_13 {dimension_numbers = #tpu.dot_dimension_numbers<[1], [0], [0], [1], [0, 0, 1, 1], [], []>} : vector<8x128xbf16>, vector<128x128xbf16>, vector<8x128xf32> -> vector<8x128xf32>
    %c1 = arith.constant 1 : index
    %c0_14 = arith.constant 0 : index
    %28 = vector.load %arg4[%c1, %c0_14] : memref<2x128xf32, #tpu.memory_space<vmem>>, vector<1x128xf32>
    %29 = vector.broadcast %28 : vector<1x128xf32> to vector<8x128xf32>
    %30 = arith.addf %27, %29 : vector<8x128xf32>
    %c0_15 = arith.constant 0 : index
    %c0_16 = arith.constant 0 : index
    %31 = vector.load %arg1[%c0_15, %c0_16] : memref<8x128xf32, #tpu.memory_space<vmem>>, vector<8x128xf32>
    %32 = arith.addf %31, %30 : vector<8x128xf32>
    %c0_17 = arith.constant 0 : index
    %c0_18 = arith.constant 0 : index
    %33 = vector.load %arg5[%c0_17, %c0_18] : memref<8x128xf32, #tpu.memory_space<vmem>>, vector<8x128xf32>
    tpu.vector_store %arg5[%c0_17, %c0_18], %32 {strides = array<i32>} : memref<8x128xf32, #tpu.memory_space<vmem>>, vector<8x128xf32>,
    return
  }
  func.func @transform_0(%arg0: i32) -> (i32, i32) {
    %c0_i32 = arith.constant 0 : i32
    %c0_i32_0 = arith.constant 0 : i32
    return %arg0, %c0_i32 : i32, i32
  }
  func.func @transform_1(%arg0: i32) -> (i32, i32) {
    %c0_i32 = arith.constant 0 : i32
    %c0_i32_0 = arith.constant 0 : i32
    %c0_i32_1 = arith.constant 0 : i32
    return %c0_i32, %c0_i32_0 : i32, i32
  }
  func.func @transform_2(%arg0: i32) -> (i32, i32) {
    %c0_i32 = arith.constant 0 : i32
    %c0_i32_0 = arith.constant 0 : i32
    %c0_i32_1 = arith.constant 0 : i32
    return %c0_i32, %c0_i32_0 : i32, i32
  }
  func.func @transform_3(%arg0: i32) -> (i32, i32) {
    %c0_i32 = arith.constant 0 : i32
    %c0_i32_0 = arith.constant 0 : i32
    %c0_i32_1 = arith.constant 0 : i32
    return %c0_i32, %c0_i32_0 : i32, i32
  }
  func.func @transform_4(%arg0: i32) -> (i32, i32) {
    %c0_i32 = arith.constant 0 : i32
    %c0_i32_0 = arith.constant 0 : i32
    return %arg0, %c0_i32 : i32, i32
  }
}

</mosaic_0001>

<llo_original>
// kernel: tpu_custom_call.1
$region0: #{tpu_custom_call.1}
  #allocation0 [shape = 'u32[]', space=smem, size = 0x4, offset = 0x4, fixed_abs, tag = 'smem constant byte address 0x4 - core index']
  #allocation1 [shape = 'u32[72,128]{1,0:T(1,128)}', space=vmem, size = 0x9000, scoped, tag = 'internal scratch']
  %s0 = inlined_call_operand.hbm [shape: f32[16,128], index: 0, kind: input, shape index: {}]
  %s1 = inlined_call_operand.hbm [shape: bf16[128,128], index: 1, kind: input, shape index: {}]
  %s2 = inlined_call_operand.hbm [shape: bf16[128,128], index: 2, kind: input, shape index: {}]
  %s3 = inlined_call_operand.vmem [shape: f32[2,128], index: 3, kind: input, shape index: {}]
  %s4 = inlined_call_operand.hbm [shape: f32[16,128], index: 4, kind: output, shape index: {}]
  %s5 = sld [smem:[#allocation0]]
  $region61: #{tpu_custom_call.1} parent=0
    _
  %s7 = ssub.s32 1, %s5
  %s8 = scalar_select 0, %s7, %s5
  $region1: #{tpu_custom_call.1} parent=0
    #allocation2 [shape = 'u8[8192]{0}', space=vmem, size = 0x2000, scoped, tag = 'input window, operand 0']
    #allocation3 [shape = 's32[2]{0}', space=sflag, size = 0x8, scoped, tag = 'scoped memory for tpu_custom_call.1']
    #allocation4 [shape = 's32[2]{0}', space=sflag, size = 0x8, scoped, tag = 'scoped memory for tpu_custom_call.1']
    #allocation5 [shape = 'u8[32768]{0}', space=vmem, size = 0x8000, scoped, tag = 'input window, operand 1, single buffered']
    #allocation6 [shape = 's32[1]{0}', space=sflag, size = 0x4, scoped, tag = 'scoped memory for tpu_custom_call.1']
    #allocation7 [shape = 'u8[32768]{0}', space=vmem, size = 0x8000, scoped, tag = 'input window, operand 2, single buffered']
    #allocation8 [shape = 'u8[8192]{0}', space=vmem, size = 0x2000, scoped, tag = 'output window, operand 0']
    %9 = vsyncpa [#allocation3], 0
    %s10 = scalar_lea.sflag [#allocation3], 1
    %11 = vsyncpa %s10, 0
    %12 = vsyncpa [#allocation6], 0
    %13 = vsyncpa [#allocation4], 0
    %s14 = scalar_lea.sflag [#allocation4], 1
    %15 = vsyncpa %s14, 0
    loop: start=0, step=1, limit=4
    $region2: #{tpu_custom_call.1} parent=1 // loop_pre_header
      _
    $region3: #{tpu_custom_call.1} parent=1 // loop_header
      %s17 = sphi 0, %s21
      %p18 = scmp.ge.s32.totalorder %s17, 4
      %s27 = sphi 0, %s29
      %s30 = sphi 0, %s27
      %s31 = sphi 0, %s30
      %s47 = sphi 0, %s31
      %s51 = sphi 0, %s51
      %s53 = sphi 0, %s51
      %s54 = sphi 0, %s53
      %s68 = sphi 0, %s54
      %s72 = sphi 0, %s72
      %s74 = sphi 0, %s72
      %s75 = sphi 0, %s74
      %s89 = sphi 0, %s75
      %s93 = sphi 0, %s93
      %s95 = sphi 0, %s93
      %s96 = sphi 0, %s95
      %s110 = sphi 0, %s96
      %s116 = sphi 0, %s118
      %s119 = sphi 0, %s116
      %s120 = sphi 0, %s119
      %s136 = sphi 0, %s120
    $region4: #{tpu_custom_call.1} parent=1 // loop_header_branch
      %20 = sbr.rel (%p18) target = $region8
    $region5: #{tpu_custom_call.1} parent=1 // loop_body
      %s22 = ssub.s32 %s17, 1
      %s23 = ssub.s32 %s17, 2
      %s24 = sadd.s32 %s17, 1
      %s25 = ssub.s32 %s17, %s24
      %p26 = scmp.eq.s32.totalorder %s25, 0
      %s28 = sadd.s32 %s27, 1
      %s29 = scalar_select %p26, %s27, %s28
      %p32 = pneg %p26
      %p33 = scmp.eq.s32.totalorder %s17, 1
      %p34 = por %p32, %p33
      %p35 = scmp.ne.s32.totalorder %s27, %s30
      %p36 = scmp.eq.s32.totalorder %s17, 0
      %p37 = por %p35, %p36
      %p38 = scmp.ne.s32.totalorder %s27, %s30
      %p39 = scmp.eq.s32.totalorder %s22, 1
      %p40 = por %p38, %p39
      %p41 = scmp.ne.s32.totalorder %s30, %s31
      %p42 = scmp.eq.s32.totalorder %s22, 0
      %p43 = por %p41, %p42
      %p44 = scmp.ne.s32.totalorder %s30, %s31
      %p45 = scmp.eq.s32.totalorder %s23, 1
      %p46 = por %p44, %p45
      %p48 = scmp.ne.s32.totalorder %s31, %s47
      %p49 = scmp.eq.s32.totalorder %s23, 0
      %p50 = por %p48, %p49
      %s52 = sadd.s32 %s51, 1
      %p55 = scmp.eq.s32.totalorder %s17, 1
      %p56 = scmp.ne.s32.totalorder %s51, %s53
      %p57 = scmp.eq.s32.totalorder %s17, 0
      %p58 = por %p56, %p57
      %p59 = scmp.ne.s32.totalorder %s51, %s53
      %p60 = scmp.eq.s32.totalorder %s22, 1
      %p61 = por %p59, %p60
      %p62 = scmp.ne.s32.totalorder %s53, %s54
      %p63 = scmp.eq.s32.totalorder %s22, 0
      %p64 = por %p62, %p63
      %p65 = scmp.ne.s32.totalorder %s53, %s54
      %p66 = scmp.eq.s32.totalorder %s23, 1
      %p67 = por %p65, %p66
      %p69 = scmp.ne.s32.totalorder %s54, %s68
      %p70 = scmp.eq.s32.totalorder %s23, 0
      %p71 = por %p69, %p70
      %s73 = sadd.s32 %s72, 1
      %p76 = scmp.eq.s32.totalorder %s17, 1
      %p77 = scmp.ne.s32.totalorder %s72, %s74
      %p78 = scmp.eq.s32.totalorder %s17, 0
      %p79 = por %p77, %p78
      %p80 = scmp.ne.s32.totalorder %s72, %s74
      %p81 = scmp.eq.s32.totalorder %s22, 1
      %p82 = por %p80, %p81
      %p83 = scmp.ne.s32.totalorder %s74, %s75
      %p84 = scmp.eq.s32.totalorder %s22, 0
      %p85 = por %p83, %p84
      %p86 = scmp.ne.s32.totalorder %s74, %s75
      %p87 = scmp.eq.s32.totalorder %s23, 1
      %p88 = por %p86, %p87
      %p90 = scmp.ne.s32.totalorder %s75, %s89
      %p91 = scmp.eq.s32.totalorder %s23, 0
      %p92 = por %p90, %p91
      %s94 = sadd.s32 %s93, 1
      %p97 = scmp.eq.s32.totalorder %s17, 1
      %p98 = scmp.ne.s32.totalorder %s93, %s95
      %p99 = scmp.eq.s32.totalorder %s17, 0
      %p100 = por %p98, %p99
      %p101 = scmp.ne.s32.totalorder %s93, %s95
      %p102 = scmp.eq.s32.totalorder %s22, 1
      %p103 = por %p101, %p102
      %p104 = scmp.ne.s32.totalorder %s95, %s96
      %p105 = scmp.eq.s32.totalorder %s22, 0
      %p106 = por %p104, %p105
      %p107 = scmp.ne.s32.totalorder %s95, %s96
      %p108 = scmp.eq.s32.totalorder %s23, 1
      %p109 = por %p107, %p108
      %p111 = scmp.ne.s32.totalorder %s96, %s110
      %p112 = scmp.eq.s32.totalorder %s23, 0
      %p113 = por %p111, %p112
      %s114 = ssub.s32 %s17, %s24
      %p115 = scmp.eq.s32.totalorder %s114, 0
      %s117 = sadd.s32 %s116, 1
      %s118 = scalar_select %p115, %s116, %s117
      %p121 = pneg %p115
      %p122 = scmp.eq.s32.totalorder %s17, 1
      %p123 = por %p121, %p122
      %p124 = scmp.ne.s32.totalorder %s116, %s119
      %p125 = scmp.eq.s32.totalorder %s17, 0
      %p126 = por %p124, %p125
      %p127 = scmp.ne.s32.totalorder %s116, %s119
      %p128 = scmp.eq.s32.totalorder %s22, 1
      %p129 = por %p127, %p128
      %p130 = scmp.ne.s32.totalorder %s119, %s120
      %p131 = scmp.eq.s32.totalorder %s22, 0
      %p132 = por %p130, %p131
      %p133 = scmp.ne.s32.totalorder %s119, %s120
      %p134 = scmp.eq.s32.totalorder %s23, 1
      %p135 = por %p133, %p134
      %p137 = scmp.ne.s32.totalorder %s120, %s136
      %p138 = scmp.eq.s32.totalorder %s23, 0
      %p139 = por %p137, %p138
      %p140 = scmp.le.s32.totalorder 1, %s17
      %p141 = scmp.lt.s32.totalorder %s17, 3
      %p142 = pnand %p140, %p141
      %p143 = pneg %p142
      // Predicated region
      $region9: #{tpu_custom_call.1} parent=5 // pred_check
        _
      $region10: #{tpu_custom_call.1} parent=5 // pred_check_branch
        %145 = sbr.rel (%p142) target = $region12
      $region11: #{tpu_custom_call.1} parent=5 // pred_region
        %s146 = ssub.s32 %s17, 1
        // Predicated region
        $region13: #{tpu_custom_call.1} parent=11 // pred_check
          %p147 = pneg %p64
        $region14: #{tpu_custom_call.1} parent=11 // pred_check_branch
          %149 = sbr.rel (%p147) target = $region16
        $region15: #{tpu_custom_call.1} parent=11 // pred_region
          %151 = vsyncadd [#allocation6], 0
          %s152 = sshll.u32 %s1, 4
          %s153 = int_to_ptr.hbm [resolvable:$true] %s152
          %s154 = sshll.u32 [#allocation5], 4
          %s155 = int_to_ptr.vmem [resolvable:$true] %s154
          %160 = dma.hbm_to_vmem [thread:$0]  %s153, 1024, %s155, [#allocation6], 64, 64, 4
        $region16: #{tpu_custom_call.1} parent=11 // pred_fallthru
          _
        // Predicated region
        $region17: #{tpu_custom_call.1} parent=11 // pred_check
          %p161 = pneg %p85
        $region18: #{tpu_custom_call.1} parent=11 // pred_check_branch
          %163 = sbr.rel (%p161) target = $region20
        $region19: #{tpu_custom_call.1} parent=11 // pred_region
          %165 = vsyncadd [#allocation6], 0
          %s166 = sshll.u32 %s2, 4
          %s167 = int_to_ptr.hbm [resolvable:$true] %s166
          %s168 = sshll.u32 [#allocation7], 4
          %s169 = int_to_ptr.vmem [resolvable:$true] %s168
          %174 = dma.hbm_to_vmem [thread:$0]  %s167, 1024, %s169, [#allocation6], 64, 64, 4
        $region20: #{tpu_custom_call.1} parent=11 // pred_fallthru
          _
        // Predicated region
        $region21: #{tpu_custom_call.1} parent=11 // pred_check
          %p175 = pneg %p106
        $region22: #{tpu_custom_call.1} parent=11 // pred_check_branch
          %177 = sbr.rel (%p175) target = $region24
        $region23: #{tpu_custom_call.1} parent=11 // pred_region
          _
        $region24: #{tpu_custom_call.1} parent=11 // pred_fallthru
          _
      $region12: #{tpu_custom_call.1} parent=5 // pred_fallthru
        _
      %p178 = scmp.lt.s32.totalorder %s17, 2
      // Predicated region
      $region25: #{tpu_custom_call.1} parent=5 // pred_check
        %p179 = pneg %p178
      $region26: #{tpu_custom_call.1} parent=5 // pred_check_branch
        %181 = sbr.rel (%p179) target = $region28
      $region27: #{tpu_custom_call.1} parent=5 // pred_region
        // Predicated region
        $region29: #{tpu_custom_call.1} parent=27 // pred_check
          %p182 = pneg %p37
        $region30: #{tpu_custom_call.1} parent=27 // pred_check_branch
          %184 = sbr.rel (%p182) target = $region32
        $region31: #{tpu_custom_call.1} parent=27 // pred_region
          %s185 = sand.u32 %s27, 1
          %s186 = scalar_lea.sflag [#allocation3], %s185
          %s187 = sand.u32 %s27, 1
          %s188 = smul.addr %s187, 8
          %s189 = scalar_lea.vmem [#allocation2], %s188
          %191 = vsyncadd %s186, 0
          %s192 = smul.addr %s17, 8
          %s193 = scalar_lea.hbm %s0, %s192
          %s195 = sshll.u32 %s193, 4
          %s196 = int_to_ptr.hbm [resolvable:$true] %s195
          %s197 = sshll.u32 %s189, 4
          %s198 = int_to_ptr.vmem [resolvable:$true] %s197
          %200 = dma.hbm_to_vmem [thread:$0]  %s196, 128, %s198, %s186
        $region32: #{tpu_custom_call.1} parent=27 // pred_fallthru
          _
      $region28: #{tpu_custom_call.1} parent=5 // pred_fallthru
        _
      %p201 = scmp.le.s32.totalorder 1, %s17
      %p202 = scmp.lt.s32.totalorder %s17, 3
      %p203 = pnand %p201, %p202
      %p204 = pneg %p203
      // Predicated region
      $region33: #{tpu_custom_call.1} parent=5 // pred_check
        _
      $region34: #{tpu_custom_call.1} parent=5 // pred_check_branch
        %206 = sbr.rel (%p203) target = $region36
      $region35: #{tpu_custom_call.1} parent=5 // pred_region
        %s207 = ssub.s32 %s17, 1
        %s208 = sand.u32 %s30, 1
        %s209 = scalar_lea.sflag [#allocation3], %s208
        %s210 = sand.u32 %s30, 1
        %s211 = smul.addr %s210, 8
        %s212 = scalar_lea.vmem [#allocation2], %s211
        // Predicated region
        $region37: #{tpu_custom_call.1} parent=35 // pred_check
          %p213 = pneg %p43
        $region38: #{tpu_custom_call.1} parent=35 // pred_check_branch
          %215 = sbr.rel (%p213) target = $region40
        $region39: #{tpu_custom_call.1} parent=35 // pred_region
          %217 = dma.done %s209, 128
        $region40: #{tpu_custom_call.1} parent=35 // pred_fallthru
          _
        // Predicated region
        $region41: #{tpu_custom_call.1} parent=35 // pred_check
          %p218 = pneg %p64
        $region42: #{tpu_custom_call.1} parent=35 // pred_check_branch
          %220 = sbr.rel (%p218) target = $region44
        $region43: #{tpu_custom_call.1} parent=35 // pred_region
          %222 = dma.done [#allocation6], 1024
        $region44: #{tpu_custom_call.1} parent=35 // pred_fallthru
          _
        // Predicated region
        $region45: #{tpu_custom_call.1} parent=35 // pred_check
          %p223 = pneg %p85
        $region46: #{tpu_custom_call.1} parent=35 // pred_check_branch
          %225 = sbr.rel (%p223) target = $region48
        $region47: #{tpu_custom_call.1} parent=35 // pred_region
          %227 = dma.done [#allocation6], 1024
        $region48: #{tpu_custom_call.1} parent=35 // pred_fallthru
          _
        %s228 = sand.u32 %s30, 1
        %s229 = scalar_lea.sflag [#allocation3], %s228
        %s230 = sand.u32 %s30, 1
        %s231 = smul.addr %s230, 8
        %s232 = scalar_lea.vmem [#allocation2], %s231
        %p233 = pneg %p43
        %p234 = pneg %p40
        %p235 = pneg %p64
        %p236 = pneg %p61
        %p237 = pneg %p85
        %p238 = pneg %p82
        %p239 = pneg %p106
        %p240 = pneg %p103
        %p241 = pneg %p132
        %p242 = pneg %p129
        %s243 = sand.u32 %s119, 1
        %s244 = scalar_lea.sflag [#allocation4], %s243
        %s245 = sand.u32 %s119, 1
        %s246 = smul.addr %s245, 8
        %s247 = scalar_lea.vmem [#allocation8], %s246
        %v248 = vld [vmem:[%s212] sm:$0xff]
        %249 = vadd.xlane.f32.xlu0 %v248
        %v250 = vpop.xlane.xlu0 %249
        %v251 = vrcp.pop 128.0
        %v252 = vmul.f32 128.0, %v251
        %v253 = vsub.f32 1.0, %v252
        %v254 = vmul.f32 %v251, %v253
        %v255 = vadd.f32 %v251, %v254
        %vm256 = vweird.f32 %v251
        %v257 = vsel %vm256, %v251, %v255
        %v258 = vmul.f32 %v250, %v257
        %v259 = vsub.f32 %v248, %v258
        %v260 = vmul.f32 %v259, %v259
        %261 = vadd.xlane.f32.xlu0 %v260
        %v262 = vpop.xlane.xlu0 %261
        %v263 = vmul.f32 %v262, %v257
        %v264 = vadd.f32 %v263, 1e-05
        %v265 = vrsqrt.pop %v264
        %v266 = vmul.f32 %v265, %v264
        %v267 = vmul.f32 %v266, %v265
        %v268 = vmul.f32 0.5, %v267
        %v269 = vsub.f32 1.5, %v268
        %v270 = vmul.f32 %v265, %v269
        %vm271 = vweird.f32 %v264
        %vm272 = vweird.f32 %v265
        %vm273 = vmor %vm271, %vm272
        %v274 = vsel %vm273, %v265, %v270
        %v275 = vmul.f32 %v259, %v274
        %v276 = vpack.c.bf16 %v275, %v275
        %v277 = vld [vmem:[#allocation5] sm:$0xf]
        %v278 = vld [vmem:[#allocation5 + $0x4] sm:$0xf]
        %v279 = vld [vmem:[#allocation5 + $0x8] sm:$0xf]
        %v280 = vld [vmem:[#allocation5 + $0xc] sm:$0xf]
        %v281 = vld [vmem:[#allocation5 + $0x10] sm:$0xf]
        %v282 = vld [vmem:[#allocation5 + $0x14] sm:$0xf]
        %v283 = vld [vmem:[#allocation5 + $0x18] sm:$0xf]
        %v284 = vld [vmem:[#allocation5 + $0x1c] sm:$0xf]
        %v285 = vld [vmem:[#allocation5 + $0x20] sm:$0xf]
        %v286 = vld [vmem:[#allocation5 + $0x24] sm:$0xf]
        %v287 = vld [vmem:[#allocation5 + $0x28] sm:$0xf]
        %v288 = vld [vmem:[#allocation5 + $0x2c] sm:$0xf]
        %v289 = vld [vmem:[#allocation5 + $0x30] sm:$0xf]
        %v290 = vld [vmem:[#allocation5 + $0x34] sm:$0xf]
        %v291 = vld [vmem:[#allocation5 + $0x38] sm:$0xf]
        %v292 = vld [vmem:[#allocation5 + $0x3c] sm:$0xf]
        %v293 = vld [vmem:[%s3] sm:$0x1]
        %v294 = vperm.slane %v293, 0
        %v311 = vunpack.c.l.b16 %v277
        %v312 = vunpack.c.l.b16 %v278
        %v313 = vunpack.c.l.b16 %v279
        %v314 = vunpack.c.l.b16 %v280
        %v315 = vunpack.c.l.b16 %v281
        %v316 = vunpack.c.l.b16 %v282
        %v317 = vunpack.c.l.b16 %v283
        %v318 = vunpack.c.l.b16 %v284
        %v319 = vunpack.c.l.b16 %v285
        %v320 = vunpack.c.l.b16 %v286
        %v321 = vunpack.c.l.b16 %v287
        %v322 = vunpack.c.l.b16 %v288
        %v323 = vunpack.c.l.b16 %v289
        %v324 = vunpack.c.l.b16 %v290
        %v325 = vunpack.c.l.b16 %v291
        %v326 = vunpack.c.l.b16 %v292
        %v327 = vpack.c.b16 %v312, %v311
        %v328 = vpack.c.b16 %v314, %v313
        %v329 = vpack.c.b16 %v316, %v315
        %v330 = vpack.c.b16 %v318, %v317
        %v331 = vpack.c.b16 %v320, %v319
        %v332 = vpack.c.b16 %v322, %v321
        %v333 = vpack.c.b16 %v324, %v323
        %v334 = vpack.c.b16 %v326, %v325
        %343 = vmatpush.bf16.msra.mxu0 %v334
        %344 = vmatpush.bf16.msra.mxu0 %v333
        %345 = vmatpush.bf16.msra.mxu0 %v332
        %346 = vmatpush.bf16.msra.mxu0 %v331
        %347 = vmatpush.bf16.msra.mxu0 %v330
        %348 = vmatpush.bf16.msra.mxu0 %v329
        %349 = vmatpush.bf16.msra.mxu0 %v328
        %350 = vmatpush.bf16.msra.mxu0 %v327
        %351 = vmatmul.bf16.gmra.mxu0 %v276
        %v352 = vpop.f32.mrf.mxu0
        %v353 = vadd.f32 %v294, %v352
        %v354 = vpop.f32.mrf.mxu0
        %355 = vdwg.mxu0
        %v356 = vmax.f32 %v353, 0.0
        %v357 = vpack.c.bf16 %v356, %v356
        %v358 = vld [vmem:[#allocation7] sm:$0xf]
        %v359 = vld [vmem:[#allocation7 + $0x4] sm:$0xf]
        %v360 = vld [vmem:[#allocation7 + $0x8] sm:$0xf]
        %v361 = vld [vmem:[#allocation7 + $0xc] sm:$0xf]
        %v362 = vld [vmem:[#allocation7 + $0x10] sm:$0xf]
        %v363 = vld [vmem:[#allocation7 + $0x14] sm:$0xf]
        %v364 = vld [vmem:[#allocation7 + $0x18] sm:$0xf]
        %v365 = vld [vmem:[#allocation7 + $0x1c] sm:$0xf]
        %v366 = vld [vmem:[#allocation7 + $0x20] sm:$0xf]
        %v367 = vld [vmem:[#allocation7 + $0x24] sm:$0xf]
        %v368 = vld [vmem:[#allocation7 + $0x28] sm:$0xf]
        %v369 = vld [vmem:[#allocation7 + $0x2c] sm:$0xf]
        %v370 = vld [vmem:[#allocation7 + $0x30] sm:$0xf]
        %v371 = vld [vmem:[#allocation7 + $0x34] sm:$0xf]
        %v372 = vld [vmem:[#allocation7 + $0x38] sm:$0xf]
        %v373 = vld [vmem:[#allocation7 + $0x3c] sm:$0xf]
        %v374 = vld [vmem:[%s3 + $0x1] sm:$0x1]
        %v375 = vperm.slane %v374, 0
        %v392 = vunpack.c.l.b16 %v358
        %v393 = vunpack.c.l.b16 %v359
        %v394 = vunpack.c.l.b16 %v360
        %v395 = vunpack.c.l.b16 %v361
        %v396 = vunpack.c.l.b16 %v362
        %v397 = vunpack.c.l.b16 %v363
        %v398 = vunpack.c.l.b16 %v364
        %v399 = vunpack.c.l.b16 %v365
        %v400 = vunpack.c.l.b16 %v366
        %v401 = vunpack.c.l.b16 %v367
        %v402 = vunpack.c.l.b16 %v368
        %v403 = vunpack.c.l.b16 %v369
        %v404 = vunpack.c.l.b16 %v370
        %v405 = vunpack.c.l.b16 %v371
        %v406 = vunpack.c.l.b16 %v372
        %v407 = vunpack.c.l.b16 %v373
        %v408 = vpack.c.b16 %v393, %v392
        %v409 = vpack.c.b16 %v395, %v394
        %v410 = vpack.c.b16 %v397, %v396
        %v411 = vpack.c.b16 %v399, %v398
        %v412 = vpack.c.b16 %v401, %v400
        %v413 = vpack.c.b16 %v403, %v402
        %v414 = vpack.c.b16 %v405, %v404
        %v415 = vpack.c.b16 %v407, %v406
        %424 = vmatpush.bf16.msra.mxu0 %v415
        %425 = vmatpush.bf16.msra.mxu0 %v414
        %426 = vmatpush.bf16.msra.mxu0 %v413
        %427 = vmatpush.bf16.msra.mxu0 %v412
        %428 = vmatpush.bf16.msra.mxu0 %v411
        %429 = vmatpush.bf16.msra.mxu0 %v410
        %430 = vmatpush.bf16.msra.mxu0 %v409
        %431 = vmatpush.bf16.msra.mxu0 %v408
        %432 = vmatmul.bf16.gmra.mxu0 %v357
        %v433 = vpop.f32.mrf.mxu0
        %v434 = vadd.f32 %v375, %v433
        %v435 = vpop.f32.mrf.mxu0
        %436 = vdwg.mxu0
        %v437 = vadd.f32 %v248, %v434
        %438 = vst [vmem:[%s247] sm:$0xff] %v437
        %s439 = sand.u32 %s119, 1
        %s440 = scalar_lea.sflag [#allocation4], %s439
        %s441 = sand.u32 %s119, 1
        %s442 = smul.addr %s441, 8
        %s443 = scalar_lea.vmem [#allocation8], %s442
        // Predicated region
        $region49: #{tpu_custom_call.1} parent=35 // pred_check
          %p444 = pneg %p129
        $region50: #{tpu_custom_call.1} parent=35 // pred_check_branch
          %446 = sbr.rel (%p444) target = $region52
        $region51: #{tpu_custom_call.1} parent=35 // pred_region
          %448 = vsyncadd %s440, 0
          %s449 = smul.addr %s22, 8
          %s450 = scalar_lea.hbm %s4, %s449
          %s452 = sshll.u32 %s443, 4
          %s453 = int_to_ptr.vmem [resolvable:$true] %s452
          %s454 = sshll.u32 %s450, 4
          %s455 = int_to_ptr.hbm [resolvable:$true] %s454
          %457 = dma.vmem_to_hbm [thread:$0]  %s453, 128, %s455, %s440
        $region52: #{tpu_custom_call.1} parent=35 // pred_fallthru
          _
      $region36: #{tpu_custom_call.1} parent=5 // pred_fallthru
        _
      %p458 = scmp.le.s32.totalorder 2, %s17
      // Predicated region
      $region53: #{tpu_custom_call.1} parent=5 // pred_check
        %p459 = pneg %p458
      $region54: #{tpu_custom_call.1} parent=5 // pred_check_branch
        %461 = sbr.rel (%p459) target = $region56
      $region55: #{tpu_custom_call.1} parent=5 // pred_region
        %s462 = ssub.s32 %s17, 2
        // Predicated region
        $region57: #{tpu_custom_call.1} parent=55 // pred_check
          %p463 = pneg %p135
        $region58: #{tpu_custom_call.1} parent=55 // pred_check_branch
          %465 = sbr.rel (%p463) target = $region60
        $region59: #{tpu_custom_call.1} parent=55 // pred_region
          %s466 = sand.u32 %s120, 1
          %s467 = scalar_lea.sflag [#allocation4], %s466
          %s468 = sand.u32 %s120, 1
          %s469 = smul.addr %s468, 8
          %s470 = scalar_lea.vmem [#allocation8], %s469
          %472 = dma.done %s467, 128
        $region60: #{tpu_custom_call.1} parent=55 // pred_fallthru
          _
      $region56: #{tpu_custom_call.1} parent=5 // pred_fallthru
        _
    $region6: #{tpu_custom_call.1} parent=1 // loop_footer
      %s21 = sadd.s32 1, %s17
    $region7: #{tpu_custom_call.1} parent=1 // loop_footer_branch
      %16 = sbr.rel target = $region3
    $region8: #{tpu_custom_call.1} parent=1 // loop_exit
      _
    %473 = vsyncpa [#allocation3], 1
    %s474 = scalar_lea.sflag [#allocation3], 1
    %475 = vsyncpa %s474, 1
    %476 = vsyncpa [#allocation6], 1
    %477 = vsyncpa [#allocation4], 1
    %s478 = scalar_lea.sflag [#allocation4], 1
    %479 = vsyncpa %s478, 1

// kernel: tpu_custom_call.1
$region0: #{tpu_custom_call.1}
  #allocation0 [shape = 'u32[]', space=smem, size = 0x4, offset = 0x4, fixed_abs, tag = 'smem constant byte address 0x4 - core index']
  #allocation1 [shape = 'u32[72,128]{1,0:T(1,128)}', space=vmem, size = 0x9000, scoped, tag = 'internal scratch']
  %s0 = inlined_call_operand.hbm [shape: f32[16,128], index: 0, kind: input, shape index: {}]
  %s1 = inlined_call_operand.hbm [shape: bf16[128,128], index: 1, kind: input, shape index: {}]
  %s2 = inlined_call_operand.hbm [shape: bf16[128,128], index: 2, kind: input, shape index: {}]
  %s3 = inlined_call_operand.vmem [shape: f32[2,128], index: 3, kind: input, shape index: {}]
  %s4 = inlined_call_operand.hbm [shape: f32[16,128], index: 4, kind: output, shape index: {}]
  %s5 = sld [smem:[#allocation0]]
  $region61: #{tpu_custom_call.1} parent=0
    _
  %s7 = ssub.s32 1, %s5
  %s8 = scalar_select 0, %s7, %s5
  $region1: #{tpu_custom_call.1} parent=0
    #allocation2 [shape = 'u8[8192]{0}', space=vmem, size = 0x2000, scoped, tag = 'input window, operand 0']
    #allocation3 [shape = 's32[2]{0}', space=sflag, size = 0x8, scoped, tag = 'scoped memory for tpu_custom_call.1']
    #allocation4 [shape = 's32[2]{0}', space=sflag, size = 0x8, scoped, tag = 'scoped memory for tpu_custom_call.1']
    #allocation5 [shape = 'u8[32768]{0}', space=vmem, size = 0x8000, scoped, tag = 'input window, operand 1, single buffered']
    #allocation6 [shape = 's32[1]{0}', space=sflag, size = 0x4, scoped, tag = 'scoped memory for tpu_custom_call.1']
    #allocation7 [shape = 'u8[32768]{0}', space=vmem, size = 0x8000, scoped, tag = 'input window, operand 2, single buffered']
    #allocation8 [shape = 'u8[8192]{0}', space=vmem, size = 0x2000, scoped, tag = 'output window, operand 0']
    %9 = vsyncpa [#allocation3], 0
    %s10 = scalar_lea.sflag [#allocation3], 1
    %11 = vsyncpa %s10, 0
    %12 = vsyncpa [#allocation6], 0
    %13 = vsyncpa [#allocation4], 0
    %s14 = scalar_lea.sflag [#allocation4], 1
    %15 = vsyncpa %s14, 0
    loop: start=0, step=1, limit=4
    $region2: #{tpu_custom_call.1} parent=1 // loop_pre_header
      _
    $region3: #{tpu_custom_call.1} parent=1 // loop_header
      %s17 = sphi 0, %s21
      %p18 = scmp.ge.s32.totalorder %s17, 4
      %s27 = sphi 0, %s29
      %s30 = sphi 0, %s27
      %s31 = sphi 0, %s30
      %s47 = sphi 0, %s31
      %s51 = sphi 0, %s51
      %s53 = sphi 0, %s51
      %s54 = sphi 0, %s53
      %s68 = sphi 0, %s54
      %s72 = sphi 0, %s72
      %s74 = sphi 0, %s72
      %s75 = sphi 0, %s74
      %s89 = sphi 0, %s75
      %s93 = sphi 0, %s93
      %s95 = sphi 0, %s93
      %s96 = sphi 0, %s95
      %s110 = sphi 0, %s96
      %s116 = sphi 0, %s118
      %s119 = sphi 0, %s116
      %s120 = sphi 0, %s119
      %s136 = sphi 0, %s120
    $region4: #{tpu_custom_call.1} parent=1 // loop_header_branch
      %20 = sbr.rel (%p18) target = $region8
    $region5: #{tpu_custom_call.1} parent=1 // loop_body
      %s22 = ssub.s32 %s17, 1
      %s23 = ssub.s32 %s17, 2
      %s24 = sadd.s32 %s17, 1
      %s25 = ssub.s32 %s17, %s24
      %p26 = scmp.eq.s32.totalorder %s25, 0
      %s28 = sadd.s32 %s27, 1
      %s29 = scalar_select %p26, %s27, %s28
      %p32 = pneg %p26
      %p33 = scmp.eq.s32.totalorder %s17, 1
      %p34 = por %p32, %p33
      %p35 = scmp.ne.s32.totalorder %s27, %s30
      %p36 = scmp.eq.s32.totalorder %s17, 0
      %p37 = por %p35, %p36
      %p38 = scmp.ne.s32.totalorder %s27, %s30
      %p39 = scmp.eq.s32.totalorder %s22, 1
      %p40 = por %p38, %p39
      %p41 = scmp.ne.s32.totalorder %s30, %s31
      %p42 = scmp.eq.s32.totalorder %s22, 0
      %p43 = por %p41, %p42
      %p44 = scmp.ne.s32.totalorder %s30, %s31
      %p45 = scmp.eq.s32.totalorder %s23, 1
      %p46 = por %p44, %p45
      %p48 = scmp.ne.s32.totalorder %s31, %s47
      %p49 = scmp.eq.s32.totalorder %s23, 0
      %p50 = por %p48, %p49
      %s52 = sadd.s32 %s51, 1
      %p55 = scmp.eq.s32.totalorder %s17, 1
      %p56 = scmp.ne.s32.totalorder %s51, %s53
      %p57 = scmp.eq.s32.totalorder %s17, 0
      %p58 = por %p56, %p57
      %p59 = scmp.ne.s32.totalorder %s51, %s53
      %p60 = scmp.eq.s32.totalorder %s22, 1
      %p61 = por %p59, %p60
      %p62 = scmp.ne.s32.totalorder %s53, %s54
      %p63 = scmp.eq.s32.totalorder %s22, 0
      %p64 = por %p62, %p63
      %p65 = scmp.ne.s32.totalorder %s53, %s54
      %p66 = scmp.eq.s32.totalorder %s23, 1
      %p67 = por %p65, %p66
      %p69 = scmp.ne.s32.totalorder %s54, %s68
      %p70 = scmp.eq.s32.totalorder %s23, 0
      %p71 = por %p69, %p70
      %s73 = sadd.s32 %s72, 1
      %p76 = scmp.eq.s32.totalorder %s17, 1
      %p77 = scmp.ne.s32.totalorder %s72, %s74
      %p78 = scmp.eq.s32.totalorder %s17, 0
      %p79 = por %p77, %p78
      %p80 = scmp.ne.s32.totalorder %s72, %s74
      %p81 = scmp.eq.s32.totalorder %s22, 1
      %p82 = por %p80, %p81
      %p83 = scmp.ne.s32.totalorder %s74, %s75
      %p84 = scmp.eq.s32.totalorder %s22, 0
      %p85 = por %p83, %p84
      %p86 = scmp.ne.s32.totalorder %s74, %s75
      %p87 = scmp.eq.s32.totalorder %s23, 1
      %p88 = por %p86, %p87
      %p90 = scmp.ne.s32.totalorder %s75, %s89
      %p91 = scmp.eq.s32.totalorder %s23, 0
      %p92 = por %p90, %p91
      %s94 = sadd.s32 %s93, 1
      %p97 = scmp.eq.s32.totalorder %s17, 1
      %p98 = scmp.ne.s32.totalorder %s93, %s95
      %p99 = scmp.eq.s32.totalorder %s17, 0
      %p100 = por %p98, %p99
      %p101 = scmp.ne.s32.totalorder %s93, %s95
      %p102 = scmp.eq.s32.totalorder %s22, 1
      %p103 = por %p101, %p102
      %p104 = scmp.ne.s32.totalorder %s95, %s96
      %p105 = scmp.eq.s32.totalorder %s22, 0
      %p106 = por %p104, %p105
      %p107 = scmp.ne.s32.totalorder %s95, %s96
      %p108 = scmp.eq.s32.totalorder %s23, 1
      %p109 = por %p107, %p108
      %p111 = scmp.ne.s32.totalorder %s96, %s110
      %p112 = scmp.eq.s32.totalorder %s23, 0
      %p113 = por %p111, %p112
      %s114 = ssub.s32 %s17, %s24
      %p115 = scmp.eq.s32.totalorder %s114, 0
      %s117 = sadd.s32 %s116, 1
      %s118 = scalar_select %p115, %s116, %s117
      %p121 = pneg %p115
      %p122 = scmp.eq.s32.totalorder %s17, 1
      %p123 = por %p121, %p122
      %p124 = scmp.ne.s32.totalorder %s116, %s119
      %p125 = scmp.eq.s32.totalorder %s17, 0
      %p126 = por %p124, %p125
      %p127 = scmp.ne.s32.totalorder %s116, %s119
      %p128 = scmp.eq.s32.totalorder %s22, 1
      %p129 = por %p127, %p128
      %p130 = scmp.ne.s32.totalorder %s119, %s120
      %p131 = scmp.eq.s32.totalorder %s22, 0
      %p132 = por %p130, %p131
      %p133 = scmp.ne.s32.totalorder %s119, %s120
      %p134 = scmp.eq.s32.totalorder %s23, 1
      %p135 = por %p133, %p134
      %p137 = scmp.ne.s32.totalorder %s120, %s136
      %p138 = scmp.eq.s32.totalorder %s23, 0
      %p139 = por %p137, %p138
      %p140 = scmp.le.s32.totalorder 1, %s17
      %p141 = scmp.lt.s32.totalorder %s17, 3
      %p142 = pnand %p140, %p141
      %p143 = pneg %p142
      // Predicated region
      $region9: #{tpu_custom_call.1} parent=5 // pred_check
        _
      $region10: #{tpu_custom_call.1} parent=5 // pred_check_branch
        %145 = sbr.rel (%p142) target = $region12
      $region11: #{tpu_custom_call.1} parent=5 // pred_region
        %s146 = ssub.s32 %s17, 1
        // Predicated region
        $region13: #{tpu_custom_call.1} parent=11 // pred_check
          %p147 = pneg %p64
        $region14: #{tpu_custom_call.1} parent=11 // pred_check_branch
          %149 = sbr.rel (%p147) target = $region16
        $region15: #{tpu_custom_call.1} parent=11 // pred_region
          %151 = vsyncadd [#allocation6], 0
          %s152 = sshll.u32 %s1, 4
          %s153 = int_to_ptr.hbm [resolvable:$true] %s152
          %s154 = sshll.u32 [#allocation5], 4
          %s155 = int_to_ptr.vmem [resolvable:$true] %s154
          %160 = dma.hbm_to_vmem [thread:$0]  %s153, 1024, %s155, [#allocation6], 64, 64, 4
        $region16: #{tpu_custom_call.1} parent=11 // pred_fallthru
          _
        // Predicated region
        $region17: #{tpu_custom_call.1} parent=11 // pred_check
          %p161 = pneg %p85
        $region18: #{tpu_custom_call.1} parent=11 // pred_check_branch
          %163 = sbr.rel (%p161) target = $region20
        $region19: #{tpu_custom_call.1} parent=11 // pred_region
          %165 = vsyncadd [#allocation6], 0
          %s166 = sshll.u32 %s2, 4
          %s167 = int_to_ptr.hbm [resolvable:$true] %s166
          %s168 = sshll.u32 [#allocation7], 4
          %s169 = int_to_ptr.vmem [resolvable:$true] %s168
          %174 = dma.hbm_to_vmem [thread:$0]  %s167, 1024, %s169, [#allocation6], 64, 64, 4
        $region20: #{tpu_custom_call.1} parent=11 // pred_fallthru
          _
        // Predicated region
        $region21: #{tpu_custom_call.1} parent=11 // pred_check
          %p175 = pneg %p106
        $region22: #{tpu_custom_call.1} parent=11 // pred_check_branch
          %177 = sbr.rel (%p175) target = $region24
        $region23: #{tpu_custom_call.1} parent=11 // pred_region
          _
        $region24: #{tpu_custom_call.1} parent=11 // pred_fallthru
          _
      $region12: #{tpu_custom_call.1} parent=5 // pred_fallthru
        _
      %p178 = scmp.lt.s32.totalorder %s17, 2
      // Predicated region
      $region25: #{tpu_custom_call.1} parent=5 // pred_check
        %p179 = pneg %p178
      $region26: #{tpu_custom_call.1} parent=5 // pred_check_branch
        %181 = sbr.rel (%p179) target = $region28
      $region27: #{tpu_custom_call.1} parent=5 // pred_region
        // Predicated region
        $region29: #{tpu_custom_call.1} parent=27 // pred_check
          %p182 = pneg %p37
        $region30: #{tpu_custom_call.1} parent=27 // pred_check_branch
          %184 = sbr.rel (%p182) target = $region32
        $region31: #{tpu_custom_call.1} parent=27 // pred_region
          %s185 = sand.u32 %s27, 1
          %s186 = scalar_lea.sflag [#allocation3], %s185
          %s187 = sand.u32 %s27, 1
          %s188 = smul.addr %s187, 8
          %s189 = scalar_lea.vmem [#allocation2], %s188
          %191 = vsyncadd %s186, 0
          %s192 = smul.addr %s17, 8
          %s193 = scalar_lea.hbm %s0, %s192
          %s195 = sshll.u32 %s193, 4
          %s196 = int_to_ptr.hbm [resolvable:$true] %s195
          %s197 = sshll.u32 %s189, 4
          %s198 = int_to_ptr.vmem [resolvable:$true] %s197
          %200 = dma.hbm_to_vmem [thread:$0]  %s196, 128, %s198, %s186
        $region32: #{tpu_custom_call.1} parent=27 // pred_fallthru
          _
      $region28: #{tpu_custom_call.1} parent=5 // pred_fallthru
        _
      %p201 = scmp.le.s32.totalorder 1, %s17
      %p202 = scmp.lt.s32.totalorder %s17, 3
      %p203 = pnand %p201, %p202
      %p204 = pneg %p203
      // Predicated region
      $region33: #{tpu_custom_call.1} parent=5 // pred_check
        _
      $region34: #{tpu_custom_call.1} parent=5 // pred_check_branch
        %206 = sbr.rel (%p203) target = $region36
      $region35: #{tpu_custom_call.1} parent=5 // pred_region
        %s207 = ssub.s32 %s17, 1
        %s208 = sand.u32 %s30, 1
        %s209 = scalar_lea.sflag [#allocation3], %s208
        %s210 = sand.u32 %s30, 1
        %s211 = smul.addr %s210, 8
        %s212 = scalar_lea.vmem [#allocation2], %s211
        // Predicated region
        $region37: #{tpu_custom_call.1} parent=35 // pred_check
          %p213 = pneg %p43
        $region38: #{tpu_custom_call.1} parent=35 // pred_check_branch
          %215 = sbr.rel (%p213) target = $region40
        $region39: #{tpu_custom_call.1} parent=35 // pred_region
          %217 = dma.done %s209, 128
        $region40: #{tpu_custom_call.1} parent=35 // pred_fallthru
          _
        // Predicated region
        $region41: #{tpu_custom_call.1} parent=35 // pred_check
          %p218 = pneg %p64
        $region42: #{tpu_custom_call.1} parent=35 // pred_check_branch
          %220 = sbr.rel (%p218) target = $region44
        $region43: #{tpu_custom_call.1} parent=35 // pred_region
          %222 = dma.done [#allocation6], 1024
        $region44: #{tpu_custom_call.1} parent=35 // pred_fallthru
          _
        // Predicated region
        $region45: #{tpu_custom_call.1} parent=35 // pred_check
          %p223 = pneg %p85
        $region46: #{tpu_custom_call.1} parent=35 // pred_check_branch
          %225 = sbr.rel (%p223) target = $region48
        $region47: #{tpu_custom_call.1} parent=35 // pred_region
          %227 = dma.done [#allocation6], 1024
        $region48: #{tpu_custom_call.1} parent=35 // pred_fallthru
          _
        %s228 = sand.u32 %s30, 1
        %s229 = scalar_lea.sflag [#allocation3], %s228
        %s230 = sand.u32 %s30, 1
        %s231 = smul.addr %s230, 8
        %s232 = scalar_lea.vmem [#allocation2], %s231
        %p233 = pneg %p43
        %p234 = pneg %p40
        %p235 = pneg %p64
        %p236 = pneg %p61
        %p237 = pneg %p85
        %p238 = pneg %p82
        %p239 = pneg %p106
        %p240 = pneg %p103
        %p241 = pneg %p132
        %p242 = pneg %p129
        %s243 = sand.u32 %s119, 1
        %s244 = scalar_lea.sflag [#allocation4], %s243
        %s245 = sand.u32 %s119, 1
        %s246 = smul.addr %s245, 8
        %s247 = scalar_lea.vmem [#allocation8], %s246
        %v248 = vld [vmem:[%s212] sm:$0xff]
        %249 = vadd.xlane.f32.xlu0 %v248
        %v250 = vpop.xlane.xlu0 %249
        %v251 = vrcp.pop 128.0
        %v252 = vmul.f32 128.0, %v251
        %v253 = vsub.f32 1.0, %v252
        %v254 = vmul.f32 %v251, %v253
        %v255 = vadd.f32 %v251, %v254
        %vm256 = vweird.f32 %v251
        %v257 = vsel %vm256, %v251, %v255
        %v258 = vmul.f32 %v250, %v257
        %v259 = vsub.f32 %v248, %v258
        %v260 = vmul.f32 %v259, %v259
        %261 = vadd.xlane.f32.xlu0 %v260
        %v262 = vpop.xlane.xlu0 %261
        %v263 = vmul.f32 %v262, %v257
        %v264 = vadd.f32 %v263, 1e-05
        %v265 = vrsqrt.pop %v264
        %v266 = vmul.f32 %v265, %v264
        %v267 = vmul.f32 %v266, %v265
        %v268 = vmul.f32 0.5, %v267
        %v269 = vsub.f32 1.5, %v268
        %v270 = vmul.f32 %v265, %v269
        %vm271 = vweird.f32 %v264
        %vm272 = vweird.f32 %v265
        %vm273 = vmor %vm271, %vm272
        %v274 = vsel %vm273, %v265, %v270
        %v275 = vmul.f32 %v259, %v274
        %v276 = vpack.c.bf16 %v275, %v275
        %v277 = vld [vmem:[#allocation5] sm:$0xf]
        %v278 = vld [vmem:[#allocation5 + $0x4] sm:$0xf]
        %v279 = vld [vmem:[#allocation5 + $0x8] sm:$0xf]
        %v280 = vld [vmem:[#allocation5 + $0xc] sm:$0xf]
        %v281 = vld [vmem:[#allocation5 + $0x10] sm:$0xf]
        %v282 = vld [vmem:[#allocation5 + $0x14] sm:$0xf]
        %v283 = vld [vmem:[#allocation5 + $0x18] sm:$0xf]
        %v284 = vld [vmem:[#allocation5 + $0x1c] sm:$0xf]
        %v285 = vld [vmem:[#allocation5 + $0x20] sm:$0xf]
        %v286 = vld [vmem:[#allocation5 + $0x24] sm:$0xf]
        %v287 = vld [vmem:[#allocation5 + $0x28] sm:$0xf]
        %v288 = vld [vmem:[#allocation5 + $0x2c] sm:$0xf]
        %v289 = vld [vmem:[#allocation5 + $0x30] sm:$0xf]
        %v290 = vld [vmem:[#allocation5 + $0x34] sm:$0xf]
        %v291 = vld [vmem:[#allocation5 + $0x38] sm:$0xf]
        %v292 = vld [vmem:[#allocation5 + $0x3c] sm:$0xf]
        %v293 = vld [vmem:[%s3] sm:$0x1]
        %v294 = vperm.slane %v293, 0
        %v311 = vunpack.c.l.b16 %v277
        %v312 = vunpack.c.l.b16 %v278
        %v313 = vunpack.c.l.b16 %v279
        %v314 = vunpack.c.l.b16 %v280
        %v315 = vunpack.c.l.b16 %v281
        %v316 = vunpack.c.l.b16 %v282
        %v317 = vunpack.c.l.b16 %v283
        %v318 = vunpack.c.l.b16 %v284
        %v319 = vunpack.c.l.b16 %v285
        %v320 = vunpack.c.l.b16 %v286
        %v321 = vunpack.c.l.b16 %v287
        %v322 = vunpack.c.l.b16 %v288
        %v323 = vunpack.c.l.b16 %v289
        %v324 = vunpack.c.l.b16 %v290
        %v325 = vunpack.c.l.b16 %v291
        %v326 = vunpack.c.l.b16 %v292
        %v327 = vpack.c.b16 %v312, %v311
        %v328 = vpack.c.b16 %v314, %v313
        %v329 = vpack.c.b16 %v316, %v315
        %v330 = vpack.c.b16 %v318, %v317
        %v331 = vpack.c.b16 %v320, %v319
        %v332 = vpack.c.b16 %v322, %v321
        %v333 = vpack.c.b16 %v324, %v323
        %v334 = vpack.c.b16 %v326, %v325
        %343 = vmatpush.bf16.msra.mxu0 %v334
        %344 = vmatpush.bf16.msra.mxu0 %v333
        %345 = vmatpush.bf16.msra.mxu0 %v332
        %346 = vmatpush.bf16.msra.mxu0 %v331
        %347 = vmatpush.bf16.msra.mxu0 %v330
        %348 = vmatpush.bf16.msra.mxu0 %v329
        %349 = vmatpush.bf16.msra.mxu0 %v328
        %350 = vmatpush.bf16.msra.mxu0 %v327
        %351 = vmatmul.bf16.gmra.mxu0 %v276
        %v352 = vpop.f32.mrf.mxu0
        %v353 = vadd.f32 %v294, %v352
        %v354 = vpop.f32.mrf.mxu0
        %355 = vdwg.mxu0
        %v356 = vmax.f32 %v353, 0.0
        %v357 = vpack.c.bf16 %v356, %v356
        %v358 = vld [vmem:[#allocation7] sm:$0xf]
        %v359 = vld [vmem:[#allocation7 + $0x4] sm:$0xf]
        %v360 = vld [vmem:[#allocation7 + $0x8] sm:$0xf]
        %v361 = vld [vmem:[#allocation7 + $0xc] sm:$0xf]
        %v362 = vld [vmem:[#allocation7 + $0x10] sm:$0xf]
        %v363 = vld [vmem:[#allocation7 + $0x14] sm:$0xf]
        %v364 = vld [vmem:[#allocation7 + $0x18] sm:$0xf]
        %v365 = vld [vmem:[#allocation7 + $0x1c] sm:$0xf]
        %v366 = vld [vmem:[#allocation7 + $0x20] sm:$0xf]
        %v367 = vld [vmem:[#allocation7 + $0x24] sm:$0xf]
        %v368 = vld [vmem:[#allocation7 + $0x28] sm:$0xf]
        %v369 = vld [vmem:[#allocation7 + $0x2c] sm:$0xf]
        %v370 = vld [vmem:[#allocation7 + $0x30] sm:$0xf]
        %v371 = vld [vmem:[#allocation7 + $0x34] sm:$0xf]
        %v372 = vld [vmem:[#allocation7 + $0x38] sm:$0xf]
        %v373 = vld [vmem:[#allocation7 + $0x3c] sm:$0xf]
        %v374 = vld [vmem:[%s3 + $0x1] sm:$0x1]
        %v375 = vperm.slane %v374, 0
        %v392 = vunpack.c.l.b16 %v358
        %v393 = vunpack.c.l.b16 %v359
        %v394 = vunpack.c.l.b16 %v360
        %v395 = vunpack.c.l.b16 %v361
        %v396 = vunpack.c.l.b16 %v362
        %v397 = vunpack.c.l.b16 %v363
        %v398 = vunpack.c.l.b16 %v364
        %v399 = vunpack.c.l.b16 %v365
        %v400 = vunpack.c.l.b16 %v366
        %v401 = vunpack.c.l.b16 %v367
        %v402 = vunpack.c.l.b16 %v368
        %v403 = vunpack.c.l.b16 %v369
        %v404 = vunpack.c.l.b16 %v370
        %v405 = vunpack.c.l.b16 %v371
        %v406 = vunpack.c.l.b16 %v372
        %v407 = vunpack.c.l.b16 %v373
        %v408 = vpack.c.b16 %v393, %v392
        %v409 = vpack.c.b16 %v395, %v394
        %v410 = vpack.c.b16 %v397, %v396
        %v411 = vpack.c.b16 %v399, %v398
        %v412 = vpack.c.b16 %v401, %v400
        %v413 = vpack.c.b16 %v403, %v402
        %v414 = vpack.c.b16 %v405, %v404
        %v415 = vpack.c.b16 %v407, %v406
        %424 = vmatpush.bf16.msra.mxu0 %v415
        %425 = vmatpush.bf16.msra.mxu0 %v414
        %426 = vmatpush.bf16.msra.mxu0 %v413
        %427 = vmatpush.bf16.msra.mxu0 %v412
        %428 = vmatpush.bf16.msra.mxu0 %v411
        %429 = vmatpush.bf16.msra.mxu0 %v410
        %430 = vmatpush.bf16.msra.mxu0 %v409
        %431 = vmatpush.bf16.msra.mxu0 %v408
        %432 = vmatmul.bf16.gmra.mxu0 %v357
        %v433 = vpop.f32.mrf.mxu0
        %v434 = vadd.f32 %v375, %v433
        %v435 = vpop.f32.mrf.mxu0
        %436 = vdwg.mxu0
        %v437 = vadd.f32 %v248, %v434
        %438 = vst [vmem:[%s247] sm:$0xff] %v437
        %s439 = sand.u32 %s119, 1
        %s440 = scalar_lea.sflag [#allocation4], %s439
        %s441 = sand.u32 %s119, 1
        %s442 = smul.addr %s441, 8
        %s443 = scalar_lea.vmem [#allocation8], %s442
        // Predicated region
        $region49: #{tpu_custom_call.1} parent=35 // pred_check
          %p444 = pneg %p129
        $region50: #{tpu_custom_call.1} parent=35 // pred_check_branch
          %446 = sbr.rel (%p444) target = $region52
        $region51: #{tpu_custom_call.1} parent=35 // pred_region
          %448 = vsyncadd %s440, 0
          %s449 = smul.addr %s22, 8
          %s450 = scalar_lea.hbm %s4, %s449
          %s452 = sshll.u32 %s443, 4
          %s453 = int_to_ptr.vmem [resolvable:$true] %s452
          %s454 = sshll.u32 %s450, 4
          %s455 = int_to_ptr.hbm [resolvable:$true] %s454
          %457 = dma.vmem_to_hbm [thread:$0]  %s453, 128, %s455, %s440
        $region52: #{tpu_custom_call.1} parent=35 // pred_fallthru
          _
      $region36: #{tpu_custom_call.1} parent=5 // pred_fallthru
        _
      %p458 = scmp.le.s32.totalorder 2, %s17
      // Predicated region
      $region53: #{tpu_custom_call.1} parent=5 // pred_check
        %p459 = pneg %p458
      $region54: #{tpu_custom_call.1} parent=5 // pred_check_branch
        %461 = sbr.rel (%p459) target = $region56
      $region55: #{tpu_custom_call.1} parent=5 // pred_region
        %s462 = ssub.s32 %s17, 2
        // Predicated region
        $region57: #{tpu_custom_call.1} parent=55 // pred_check
          %p463 = pneg %p135
        $region58: #{tpu_custom_call.1} parent=55 // pred_check_branch
          %465 = sbr.rel (%p463) target = $region60
        $region59: #{tpu_custom_call.1} parent=55 // pred_region
          %s466 = sand.u32 %s120, 1
          %s467 = scalar_lea.sflag [#allocation4], %s466
          %s468 = sand.u32 %s120, 1
          %s469 = smul.addr %s468, 8
          %s470 = scalar_lea.vmem [#allocation8], %s469
          %472 = dma.done %s467, 128
        $region60: #{tpu_custom_call.1} parent=55 // pred_fallthru
          _
      $region56: #{tpu_custom_call.1} parent=5 // pred_fallthru
        _
    $region6: #{tpu_custom_call.1} parent=1 // loop_footer
      %s21 = sadd.s32 1, %s17
    $region7: #{tpu_custom_call.1} parent=1 // loop_footer_branch
      %16 = sbr.rel target = $region3
    $region8: #{tpu_custom_call.1} parent=1 // loop_exit
      _
    %473 = vsyncpa [#allocation3], 1
    %s474 = scalar_lea.sflag [#allocation3], 1
    %475 = vsyncpa %s474, 1
    %476 = vsyncpa [#allocation6], 1
    %477 = vsyncpa [#allocation4], 1
    %s478 = scalar_lea.sflag [#allocation4], 1
    %479 = vsyncpa %s478, 1

</llo_original>
